<compile_context>
chip_gen: v7x
topology: tpu7x:2x2x1
jax: 0.10.0
libtpu: 0.0.40
codegen_flags: <defaults>
</compile_context>

<pallas_src>
import jax
import jax.numpy as jnp
from jax import lax
from jax.experimental import pallas as pl
from jax.experimental.pallas import tpu as pltpu


def _round_up(x, m):
    return ((x + m - 1) // m) * m


def _cdiv(a, b):
    return -(-a // b)


def _qspa_reassoc_kernel(x_ref, w_ref, b_ref, o_ref):
    # Reassociated form: out[j] = x[j] @ (W @ x[j])^T + bias.
    # x_ref: (TB, Sp, F)   compute dtype
    # w_ref: (Op, Sp)      compute dtype (original Linear weight, padded)
    # b_ref: (1, Op)       f32
    # o_ref: (TB, Sp, Op)  f32
    tb = x_ref.shape[0]
    w = w_ref[...]
    bias = b_ref[...]
    for j in range(tb):                      # static unroll over the batch block
        xj = x_ref[j]                        # (Sp, F)
        # u = W @ x[j] : (Op, Sp) @ (Sp, F) -> (Op, F), plain 2-D MXU matmul.
        u = jnp.dot(w, xj, preferred_element_type=jnp.float32)
        # y = x[j] @ u^T : contract F (last dim of both operands) -> (Sp, Op).
        y = lax.dot_general(
            xj, u.astype(xj.dtype),
            dimension_numbers=(((1,), (1,)), ((), ())),
            preferred_element_type=jnp.float32)
        o_ref[j] = (y + bias).astype(o_ref.dtype)


def _qspa_gram_kernel(x_ref, w_ref, b_ref, o_ref):
    # Gram form: out = (x @ x^T) @ W^T + bias.  Only selected when S is small
    # relative to F and O, so the (TB, Sp, Sp) f32 temp stays bounded.
    # x_ref: (TB, Sp, F), w_ref: (Sp, Op) = W^T padded, b_ref: (1, Op),
    # o_ref: (TB, Sp, Op)
    tb, sp, op = o_ref.shape
    x = x_ref[...]
    # Batched NT matmul on the MXU with f32 accumulation.
    g = jnp.einsum("bsf,btf->bst", x, x, preferred_element_type=jnp.float32)
    # Fold batch into the MXU M dimension; Sp is a multiple of 8 so the
    # reshapes are layout no-ops.  Keep the linear-layer input in f32.
    y = jnp.dot(g.reshape(tb * sp, sp), w_ref[...].astype(jnp.float32),
                preferred_element_type=jnp.float32)
    y = y + b_ref[...]
    o_ref[...] = y.reshape(tb, sp, op).astype(o_ref.dtype)


def _vmem_limit_bytes():
    cap = None
    try:
        cap = int(pltpu.get_tpu_info().vmem_capacity_bytes)
    except Exception:
        cap = None
    if cap is None or cap <= 0:
        # Safe on every generation (v7x has only 64 MiB physical per core).
        return 48 << 20
    return max(32 << 20, min(96 << 20, (cap * 3) // 4))


def quadratic_scalar_product_attention(x, weight, bias, *, block_b=None,
                                        reassociate=None,
                                        compute_dtype=jnp.float32):
    """out[b] = (x[b] @ x[b]^T) @ weight^T + bias.

    x:      (B, S, F)
    weight: (O, S)   -- nn.Linear(sequence_length, output_features).weight
    bias:   (O,)
    returns (B, S, O) float32
    """
    B, S, F = x.shape
    O = weight.shape[0]
    assert weight.shape == (O, S)
    assert bias.shape == (O,)

    compute_dtype = jnp.dtype(compute_dtype)
    x_bytes = compute_dtype.itemsize
    sub = 16 if x_bytes == 2 else 8
    Sp = _round_up(S, sub)                 # sublane-aligned sequence length
    Op = _round_up(max(O, 1), 128)         # lane-dense output / MXU N dim

    # Reassociate out = x @ (x^T W^T) whenever it is cheaper than the Gram
    # form: 4*S*F*O flops vs 2*S^2*(F+O) flops  <=>  2*F*Op < Sp*(F+Op).
    if reassociate is None:
        reassociate = (2 * F * Op) < (Sp * (F + Op))

    vmem_limit = _vmem_limit_bytes()

    # Batch-block sizing: double-buffered x/out blocks + in-kernel temps must
    # stay well inside the scoped-VMEM budget.
    x_row = Sp * F * x_bytes
    out_row = Sp * Op * 4
    if reassociate:
        temp_row = Sp * Op * 4 + F * Op * 4
    else:
        temp_row = Sp * Sp * 4 + Sp * Op * 4
    fixed = 2 * (Sp * Op * x_bytes + Op * 4)            # weight + bias
    budget = max(vmem_limit // 2 - fixed, x_row + out_row + temp_row)
    denom = 2 * (x_row + out_row) + temp_row
    auto_block = max(1, budget // max(denom, 1))

    if block_b is None:
        block_b = int(auto_block)
    block_b = max(1, min(int(block_b), B))
    # Keep the statically unrolled reassociated kernel a reasonable size.
    block_b = min(block_b, 64 if reassociate else 256)
    # Ensure >= min(B, 4) grid steps (and an even count) so the "parallel"
    # axis splits across TensorCores and the pipeline has work to overlap.
    block_b = min(block_b, _cdiv(B, min(B, 4)))
    num_blocks = _cdiv(B, block_b)
    if num_blocks > 1 and num_blocks % 2 == 1:
        num_blocks += 1
    Bp = num_blocks * block_b

    # Pad inputs (zero padding is exact: padded S/F/O rows/cols contribute 0).
    x_p = jnp.pad(x.astype(compute_dtype),
                  ((0, Bp - B), (0, Sp - S), (0, 0)))
    if reassociate:
        w_p = jnp.pad(weight.astype(compute_dtype),
                      ((0, Op - O), (0, Sp - S)))                 # (Op, Sp)
        w_spec = pl.BlockSpec((Op, Sp), lambda b: (0, 0))
        kernel = _qspa_reassoc_kernel
        flops = 4 * Bp * Sp * F * Op
    else:
        w_p = jnp.pad(weight.T.astype(compute_dtype),
                      ((0, Sp - S), (0, Op - O)))                 # (Sp, Op)
        w_spec = pl.BlockSpec((Sp, Op), lambda b: (0, 0))
        kernel = _qspa_gram_kernel
        flops = 2 * Bp * Sp * Sp * (F + Op)
    b_p = jnp.pad(bias.astype(jnp.float32), (0, Op - O)).reshape(1, Op)

    cost = pl.CostEstimate(
        flops=int(flops),
        transcendentals=0,
        bytes_accessed=int(x_p.size * x_bytes + w_p.size * x_bytes
                           + b_p.size * 4 + Bp * Sp * Op * 4),
    )

    out = pl.pallas_call(
        kernel,
        out_shape=jax.ShapeDtypeStruct((Bp, Sp, Op), jnp.float32),
        grid=(num_blocks,),
        in_specs=[
            pl.BlockSpec((block_b, Sp, F), lambda b: (b, 0, 0)),   # x block
            w_spec,                                                # weight
            pl.BlockSpec((1, Op), lambda b: (0, 0)),               # bias
        ],
        out_specs=pl.BlockSpec((block_b, Sp, Op), lambda b: (b, 0, 0)),
        compiler_params=pltpu.CompilerParams(
            dimension_semantics=("parallel",),
            vmem_limit_bytes=int(vmem_limit),
        ),
        cost_estimate=cost,
    )(x_p, w_p, b_p)
    return out[:B, :S, :O]


def _reference(x, weight, bias):
    g = jnp.einsum("bsf,btf->bst", x, x)               # x[b] @ x[b]^T
    return jnp.einsum("bst,ot->bso", g, weight) + bias


if __name__ == "__main__":
    batch, seq, in_feat, out_feat = 2, 8, 4, 4

    key = jax.random.PRNGKey(0)
    kw, kb, kx = jax.random.split(key, 3)
    bound = 1.0 / (seq ** 0.5)                         # nn.Linear(seq, out) init
    weight = jax.random.uniform(kw, (out_feat, seq), minval=-bound, maxval=bound,
                                dtype=jnp.float32)
    bias = jax.random.uniform(kb, (out_feat,), minval=-bound, maxval=bound,
                              dtype=jnp.float32)
    x = jax.random.normal(kx, (batch, seq, in_feat), dtype=jnp.float32)

    ref = _reference(x, weight, bias)

    # Auto-selected (reassociated) path.
    out = jax.block_until_ready(quadratic_scalar_product_attention(x, weight, bias))
    assert out.shape == (batch, seq, out_feat)
    assert not bool(jnp.isnan(out).any())
    err = float(jnp.max(jnp.abs(out - ref)))
    assert bool(jnp.allclose(out, ref, rtol=5e-2, atol=5e-2)), err

    # Forced Gram path (covers the second kernel).
    out_g = jax.block_until_ready(
        quadratic_scalar_product_attention(x, weight, bias, reassociate=False))
    err_g = float(jnp.max(jnp.abs(out_g - ref)))
    assert bool(jnp.allclose(out_g, ref, rtol=5e-2, atol=5e-2)), err_g

    # Ragged shape: exercises S / O padding and odd-batch grid rounding.
    b2, s2, f2, o2 = 3, 10, 5, 7
    k2w, k2b, k2x = jax.random.split(jax.random.PRNGKey(0), 3)
    bound2 = 1.0 / (s2 ** 0.5)
    w2 = jax.random.uniform(k2w, (o2, s2), minval=-bound2, maxval=bound2,
                            dtype=jnp.float32)
    bb2 = jax.random.uniform(k2b, (o2,), minval=-bound2, maxval=bound2,
                             dtype=jnp.float32)
    x2 = jax.random.normal(k2x, (b2, s2, f2), dtype=jnp.float32)
    out2 = jax.block_until_ready(quadratic_scalar_product_attention(x2, w2, bb2))
    ref2 = _reference(x2, w2, bb2)
    assert out2.shape == (b2, s2, o2)
    assert not bool(jnp.isnan(out2).any())
    err2 = float(jnp.max(jnp.abs(out2 - ref2)))
    assert bool(jnp.allclose(out2, ref2, rtol=5e-2, atol=5e-2)), err2

    print("KERNEL_OK")
</pallas_src>

<mosaic_0001>
module attributes {stable_mosaic.version = 11 : i64} {
  func.func @_qspa_reassoc_kernel(%arg0: i32, %arg1: memref<1x8x4xf32, #tpu.memory_space<vmem>>, %arg2: memref<128x8xf32, #tpu.memory_space<vmem>>, %arg3: memref<1x128xf32, #tpu.memory_space<vmem>>, %arg4: memref<1x8x128xf32, #tpu.memory_space<vmem>>) attributes {dimension_semantics = [#tpu.dimension_semantics<parallel>], iteration_bounds = array<i64: 2>, scalar_prefetch = 0 : i64, scratch_operands = 0 : i64, tpu.core_type = #tpu.core_type<tc>, window_params = [{transform_indices = @transform_0, window_bounds = array<i64: 1, 8, 4>}, {pipeline_mode = #tpu.pipeline_mode<synchronous>, transform_indices = @transform_1, window_bounds = array<i64: 128, 8>}, {pipeline_mode = #tpu.pipeline_mode<synchronous>, transform_indices = @transform_2, window_bounds = array<i64: 1, 128>}, {transform_indices = @transform_3, window_bounds = array<i64: 1, 8, 128>}]} {
    %c0 = arith.constant 0 : index
    %c0_0 = arith.constant 0 : index
    %0 = vector.load %arg2[%c0, %c0_0] : memref<128x8xf32, #tpu.memory_space<vmem>>, vector<128x8xf32>
    %c0_1 = arith.constant 0 : index
    %c0_2 = arith.constant 0 : index
    %1 = vector.load %arg3[%c0_1, %c0_2] : memref<1x128xf32, #tpu.memory_space<vmem>>, vector<1x128xf32>
    %c0_3 = arith.constant 0 : index
    %c0_4 = arith.constant 0 : index
    %c0_5 = arith.constant 0 : index
    %2 = vector.load %arg1[%c0_3, %c0_4, %c0_5] : memref<1x8x4xf32, #tpu.memory_space<vmem>>, vector<1x8x4xf32>
    %3 = vector.shape_cast %2 : vector<1x8x4xf32> to vector<8x4xf32>
    %cst = arith.constant dense<0.000000e+00> : vector<128x4xf32>
    %4 = tpu.matmul %0, %3, %cst {dimension_numbers = #tpu.dot_dimension_numbers<[1], [0], [0], [1], [0, 0, 1, 1], [], []>} : vector<128x8xf32>, vector<8x4xf32>, vector<128x4xf32> -> vector<128x4xf32>
    %cst_6 = arith.constant dense<0.000000e+00> : vector<8x128xf32>
    %5 = tpu.matmul %3, %4, %cst_6 {dimension_numbers = #tpu.dot_dimension_numbers<[1], [1], [0], [0], [0, 0, 1, 0], [], []>} : vector<8x4xf32>, vector<128x4xf32>, vector<8x128xf32> -> vector<8x128xf32>
    %6 = vector.broadcast %1 : vector<1x128xf32> to vector<8x128xf32>
    %7 = arith.addf %5, %6 : vector<8x128xf32>
    %c0_7 = arith.constant 0 : index
    %c0_8 = arith.constant 0 : index
    %c0_9 = arith.constant 0 : index
    %8 = vector.load %arg4[%c0_7, %c0_8, %c0_9] : memref<1x8x128xf32, #tpu.memory_space<vmem>>, vector<1x8x128xf32>
    %9 = vector.shape_cast %8 : vector<1x8x128xf32> to vector<8x128xf32>
    %10 = vector.shape_cast %7 : vector<8x128xf32> to vector<1x8x128xf32>
    tpu.vector_store %arg4[%c0_7, %c0_8, %c0_9], %10 {strides = array<i32>} : memref<1x8x128xf32, #tpu.memory_space<vmem>>, vector<1x8x128xf32>,
    return
  }
  func.func @transform_0(%arg0: i32) -> (i32, i32, i32) {
    %c0_i32 = arith.constant 0 : i32
    %c0_i32_0 = arith.constant 0 : i32
    %c0_i32_1 = arith.constant 0 : i32
    return %arg0, %c0_i32, %c0_i32_0 : i32, i32, i32
  }
  func.func @transform_1(%arg0: i32) -> (i32, i32) {
    %c0_i32 = arith.constant 0 : i32
    %c0_i32_0 = arith.constant 0 : i32
    %c0_i32_1 = arith.constant 0 : i32
    return %c0_i32, %c0_i32_0 : i32, i32
  }
  func.func @transform_2(%arg0: i32) -> (i32, i32) {
    %c0_i32 = arith.constant 0 : i32
    %c0_i32_0 = arith.constant 0 : i32
    %c0_i32_1 = arith.constant 0 : i32
    return %c0_i32, %c0_i32_0 : i32, i32
  }
  func.func @transform_3(%arg0: i32) -> (i32, i32, i32) {
    %c0_i32 = arith.constant 0 : i32
    %c0_i32_0 = arith.constant 0 : i32
    %c0_i32_1 = arith.constant 0 : i32
    return %arg0, %c0_i32, %c0_i32_0 : i32, i32, i32
  }
}

</mosaic_0001>

<llo_original>
// kernel: tpu_custom_call.1
$region0: #{tpu_custom_call.1}
  #allocation0 [shape = 'u32[]', space=smem, size = 0x4, offset = 0x4, fixed_abs, tag = 'smem constant byte address 0x4 - core index']
  #allocation1 [shape = 'u32[144,128]{1,0:T(1,128)}', space=vmem, size = 0x12000, scoped, tag = 'internal scratch']
  %s0 = inlined_call_operand.vmem [shape: f32[2,8,4], index: 0, kind: input, shape index: {}]
  %s1 = inlined_call_operand.vmem [shape: f32[128,8], index: 1, kind: input, shape index: {}]
  %s2 = inlined_call_operand.vmem [shape: f32[1,128], index: 2, kind: input, shape index: {}]
  %s3 = inlined_call_operand.hbm [shape: f32[2,8,128], index: 3, kind: output, shape index: {}]
  %s4 = sld [smem:[#allocation0]]
  $region45: #{tpu_custom_call.1} parent=0
    _
  %s6 = ssub.s32 1, %s4
  %s7 = scalar_select 0, %s6, %s4
  $region1: #{tpu_custom_call.1} parent=0
    #allocation2 [shape = 'u8[8192]{0}', space=vmem, size = 0x2000, scoped, tag = 'output window, operand 0']
    #allocation3 [shape = 's32[2]{0}', space=sflag, size = 0x8, scoped, tag = 'scoped memory for tpu_custom_call.1']
    %8 = vsyncpa [#allocation3], 0
    %s9 = scalar_lea.sflag [#allocation3], 1
    %10 = vsyncpa %s9, 0
    loop: start=0, step=1, limit=4
    $region2: #{tpu_custom_call.1} parent=1 // loop_pre_header
      _
    $region3: #{tpu_custom_call.1} parent=1 // loop_header
      %s12 = sphi 0, %s16
      %p13 = scmp.ge.s32.totalorder %s12, 4
      %s22 = sphi 0, %s24
      %s25 = sphi 0, %s22
      %s26 = sphi 0, %s25
      %s42 = sphi 0, %s26
      %s46 = sphi 0, %s46
      %s48 = sphi 0, %s46
      %s49 = sphi 0, %s48
      %s63 = sphi 0, %s49
      %s67 = sphi 0, %s67
      %s69 = sphi 0, %s67
      %s70 = sphi 0, %s69
      %s84 = sphi 0, %s70
      %s90 = sphi 0, %s92
      %s93 = sphi 0, %s90
      %s94 = sphi 0, %s93
      %s110 = sphi 0, %s94
    $region4: #{tpu_custom_call.1} parent=1 // loop_header_branch
      %15 = sbr.rel (%p13) target = $region8
    $region5: #{tpu_custom_call.1} parent=1 // loop_body
      %s17 = ssub.s32 %s12, 1
      %s18 = ssub.s32 %s12, 2
      %s19 = sadd.s32 %s12, 1
      %s20 = ssub.s32 %s12, %s19
      %p21 = scmp.eq.s32.totalorder %s20, 0
      %s23 = sadd.s32 %s22, 1
      %s24 = scalar_select %p21, %s22, %s23
      %p27 = pneg %p21
      %p28 = scmp.eq.s32.totalorder %s12, 1
      %p29 = por %p27, %p28
      %p30 = scmp.ne.s32.totalorder %s22, %s25
      %p31 = scmp.eq.s32.totalorder %s12, 0
      %p32 = por %p30, %p31
      %p33 = scmp.ne.s32.totalorder %s22, %s25
      %p34 = scmp.eq.s32.totalorder %s17, 1
      %p35 = por %p33, %p34
      %p36 = scmp.ne.s32.totalorder %s25, %s26
      %p37 = scmp.eq.s32.totalorder %s17, 0
      %p38 = por %p36, %p37
      %p39 = scmp.ne.s32.totalorder %s25, %s26
      %p40 = scmp.eq.s32.totalorder %s18, 1
      %p41 = por %p39, %p40
      %p43 = scmp.ne.s32.totalorder %s26, %s42
      %p44 = scmp.eq.s32.totalorder %s18, 0
      %p45 = por %p43, %p44
      %s47 = sadd.s32 %s46, 1
      %p50 = scmp.eq.s32.totalorder %s12, 1
      %p51 = scmp.ne.s32.totalorder %s46, %s48
      %p52 = scmp.eq.s32.totalorder %s12, 0
      %p53 = por %p51, %p52
      %p54 = scmp.ne.s32.totalorder %s46, %s48
      %p55 = scmp.eq.s32.totalorder %s17, 1
      %p56 = por %p54, %p55
      %p57 = scmp.ne.s32.totalorder %s48, %s49
      %p58 = scmp.eq.s32.totalorder %s17, 0
      %p59 = por %p57, %p58
      %p60 = scmp.ne.s32.totalorder %s48, %s49
      %p61 = scmp.eq.s32.totalorder %s18, 1
      %p62 = por %p60, %p61
      %p64 = scmp.ne.s32.totalorder %s49, %s63
      %p65 = scmp.eq.s32.totalorder %s18, 0
      %p66 = por %p64, %p65
      %s68 = sadd.s32 %s67, 1
      %p71 = scmp.eq.s32.totalorder %s12, 1
      %p72 = scmp.ne.s32.totalorder %s67, %s69
      %p73 = scmp.eq.s32.totalorder %s12, 0
      %p74 = por %p72, %p73
      %p75 = scmp.ne.s32.totalorder %s67, %s69
      %p76 = scmp.eq.s32.totalorder %s17, 1
      %p77 = por %p75, %p76
      %p78 = scmp.ne.s32.totalorder %s69, %s70
      %p79 = scmp.eq.s32.totalorder %s17, 0
      %p80 = por %p78, %p79
      %p81 = scmp.ne.s32.totalorder %s69, %s70
      %p82 = scmp.eq.s32.totalorder %s18, 1
      %p83 = por %p81, %p82
      %p85 = scmp.ne.s32.totalorder %s70, %s84
      %p86 = scmp.eq.s32.totalorder %s18, 0
      %p87 = por %p85, %p86
      %s88 = ssub.s32 %s12, %s19
      %p89 = scmp.eq.s32.totalorder %s88, 0
      %s91 = sadd.s32 %s90, 1
      %s92 = scalar_select %p89, %s90, %s91
      %p95 = pneg %p89
      %p96 = scmp.eq.s32.totalorder %s12, 1
      %p97 = por %p95, %p96
      %p98 = scmp.ne.s32.totalorder %s90, %s93
      %p99 = scmp.eq.s32.totalorder %s12, 0
      %p100 = por %p98, %p99
      %p101 = scmp.ne.s32.totalorder %s90, %s93
      %p102 = scmp.eq.s32.totalorder %s17, 1
      %p103 = por %p101, %p102
      %p104 = scmp.ne.s32.totalorder %s93, %s94
      %p105 = scmp.eq.s32.totalorder %s17, 0
      %p106 = por %p104, %p105
      %p107 = scmp.ne.s32.totalorder %s93, %s94
      %p108 = scmp.eq.s32.totalorder %s18, 1
      %p109 = por %p107, %p108
      %p111 = scmp.ne.s32.totalorder %s94, %s110
      %p112 = scmp.eq.s32.totalorder %s18, 0
      %p113 = por %p111, %p112
      %p114 = scmp.le.s32.totalorder 1, %s12
      %p115 = scmp.lt.s32.totalorder %s12, 3
      %p116 = pnand %p114, %p115
      %p117 = pneg %p116
      // Predicated region
      $region9: #{tpu_custom_call.1} parent=5 // pred_check
        _
      $region10: #{tpu_custom_call.1} parent=5 // pred_check_branch
        %119 = sbr.rel (%p116) target = $region12
      $region11: #{tpu_custom_call.1} parent=5 // pred_region
        %s120 = ssub.s32 %s12, 1
        // Predicated region
        $region13: #{tpu_custom_call.1} parent=11 // pred_check
          %p121 = pneg %p59
        $region14: #{tpu_custom_call.1} parent=11 // pred_check_branch
          %123 = sbr.rel (%p121) target = $region16
        $region15: #{tpu_custom_call.1} parent=11 // pred_region
          _
        $region16: #{tpu_custom_call.1} parent=11 // pred_fallthru
          _
        // Predicated region
        $region17: #{tpu_custom_call.1} parent=11 // pred_check
          %p124 = pneg %p80
        $region18: #{tpu_custom_call.1} parent=11 // pred_check_branch
          %126 = sbr.rel (%p124) target = $region20
        $region19: #{tpu_custom_call.1} parent=11 // pred_region
          _
        $region20: #{tpu_custom_call.1} parent=11 // pred_fallthru
          _
      $region12: #{tpu_custom_call.1} parent=5 // pred_fallthru
        _
      %p127 = scmp.lt.s32.totalorder %s12, 2
      // Predicated region
      $region21: #{tpu_custom_call.1} parent=5 // pred_check
        %p128 = pneg %p127
      $region22: #{tpu_custom_call.1} parent=5 // pred_check_branch
        %130 = sbr.rel (%p128) target = $region24
      $region23: #{tpu_custom_call.1} parent=5 // pred_region
        // Predicated region
        $region25: #{tpu_custom_call.1} parent=23 // pred_check
          %p131 = pneg %p32
        $region26: #{tpu_custom_call.1} parent=23 // pred_check_branch
          %133 = sbr.rel (%p131) target = $region28
        $region27: #{tpu_custom_call.1} parent=23 // pred_region
          %p134 = scmp.lt.s32.totalorder %s12, 1
          %s135 = scalar_select %p134, %s12, 1
          %s136 = smul.addr %s135, 8
          %s137 = scalar_lea.vmem %s0, %s136
        $region28: #{tpu_custom_call.1} parent=23 // pred_fallthru
          _
      $region24: #{tpu_custom_call.1} parent=5 // pred_fallthru
        _
      %p138 = scmp.le.s32.totalorder 1, %s12
      %p139 = scmp.lt.s32.totalorder %s12, 3
      %p140 = pnand %p138, %p139
      %p141 = pneg %p140
      // Predicated region
      $region29: #{tpu_custom_call.1} parent=5 // pred_check
        _
      $region30: #{tpu_custom_call.1} parent=5 // pred_check_branch
        %143 = sbr.rel (%p140) target = $region32
      $region31: #{tpu_custom_call.1} parent=5 // pred_region
        %s144 = ssub.s32 %s12, 1
        %p145 = scmp.lt.s32.totalorder %s17, 1
        %s146 = scalar_select %p145, %s17, 1
        %s147 = smul.addr %s146, 8
        %s148 = scalar_lea.vmem %s0, %s147
        %p149 = pneg %p38
        %p150 = pneg %p35
        %p151 = pneg %p59
        %p152 = pneg %p56
        %p153 = pneg %p80
        %p154 = pneg %p77
        %p155 = pneg %p106
        %p156 = pneg %p103
        %s157 = sand.u32 %s93, 1
        %s158 = scalar_lea.sflag [#allocation3], %s157
        %s159 = sand.u32 %s93, 1
        %s160 = smul.addr %s159, 8
        %s161 = scalar_lea.vmem [#allocation2], %s160
        %p162 = scmp.lt.s32.totalorder %s17, 1
        %s163 = scalar_select %p162, %s17, 1
        %s164 = smul.addr %s163, 8
        %s165 = scalar_lea.vmem %s0, %s164
        %v166 = vld [vmem:[%s1] sm:$0xff]
        %v167 = vld [vmem:[%s1 + $0x8] sm:$0xff]
        %v168 = vld [vmem:[%s1 + $0x10] sm:$0xff]
        %v169 = vld [vmem:[%s1 + $0x18] sm:$0xff]
        %v170 = vld [vmem:[%s1 + $0x20] sm:$0xff]
        %v171 = vld [vmem:[%s1 + $0x28] sm:$0xff]
        %v172 = vld [vmem:[%s1 + $0x30] sm:$0xff]
        %v173 = vld [vmem:[%s1 + $0x38] sm:$0xff]
        %v174 = vld [vmem:[%s1 + $0x40] sm:$0xff]
        %v175 = vld [vmem:[%s1 + $0x48] sm:$0xff]
        %v176 = vld [vmem:[%s1 + $0x50] sm:$0xff]
        %v177 = vld [vmem:[%s1 + $0x58] sm:$0xff]
        %v178 = vld [vmem:[%s1 + $0x60] sm:$0xff]
        %v179 = vld [vmem:[%s1 + $0x68] sm:$0xff]
        %v180 = vld [vmem:[%s1 + $0x70] sm:$0xff]
        %v181 = vld [vmem:[%s1 + $0x78] sm:$0xff]
        %v182 = vld [vmem:[%s2] sm:$0x1]
        %v183 = vld [vmem:[%s165] sm:$0xff]
        %vm184 = vcmask 64512
        %v186 = vsel %vm184, %v166, 0
        %v189 = vsel %vm184, %v167, 0
        %v192 = vsel %vm184, %v168, 0
        %v195 = vsel %vm184, %v169, 0
        %v198 = vsel %vm184, %v170, 0
        %v201 = vsel %vm184, %v171, 0
        %v204 = vsel %vm184, %v172, 0
        %v207 = vsel %vm184, %v173, 0
        %v210 = vsel %vm184, %v174, 0
        %v213 = vsel %vm184, %v175, 0
        %v216 = vsel %vm184, %v176, 0
        %v219 = vsel %vm184, %v177, 0
        %v222 = vsel %vm184, %v178, 0
        %v225 = vsel %vm184, %v179, 0
        %v228 = vsel %vm184, %v180, 0
        %v231 = vsel %vm184, %v181, 0
        %233 = vmatprep.subr.mxu0 0.0
        %234 = vmatpush1.msra.mxu0 %v183
        %235 = vmatprep.subr.mxu0 0.0
        %236 = vmatpush1.msra.mxu0 0.0
        %237 = vmatprep.subr.mxu0 0.0
        %238 = vmatpush1.msra.mxu0 0.0
        %239 = vmatprep.subr.mxu0 0.0
        %240 = vmatpush1.msra.mxu0 0.0
        %241 = vmatprep.subr.mxu0 0.0
        %242 = vmatpush1.msra.mxu0 0.0
        %243 = vmatprep.subr.mxu0 0.0
        %244 = vmatpush1.msra.mxu0 0.0
        %245 = vmatprep.subr.mxu0 0.0
        %246 = vmatpush1.msra.mxu0 0.0
        %247 = vmatprep.subr.mxu0 0.0
        %248 = vmatpush1.msra.mxu0 0.0
        %249 = vmatprep.subr.mxu0 0.0
        %250 = vmatpush1.msra.mxu0 0.0
        %251 = vmatprep.subr.mxu0 0.0
        %252 = vmatpush1.msra.mxu0 0.0
        %253 = vmatprep.subr.mxu0 0.0
        %254 = vmatpush1.msra.mxu0 0.0
        %255 = vmatprep.subr.mxu0 0.0
        %256 = vmatpush1.msra.mxu0 0.0
        %257 = vmatprep.subr.mxu0 0.0
        %258 = vmatpush1.msra.mxu0 0.0
        %259 = vmatprep.subr.mxu0 0.0
        %260 = vmatpush1.msra.mxu0 0.0
        %261 = vmatprep.subr.mxu0 0.0
        %262 = vmatpush1.msra.mxu0 0.0
        %263 = vmatprep.subr.mxu0 0.0
        %264 = vmatpush1.msra.mxu0 0.0
        %265 = vmatprep.subr.mxu0 0.0
        %266 = vmatpush1.msra.mxu0 0.0
        %267 = vmatprep.subr.mxu0 0.0
        %268 = vmatpush1.msra.mxu0 0.0
        %269 = vmatprep.subr.mxu0 0.0
        %270 = vmatpush1.msra.mxu0 0.0
        %271 = vmatprep.subr.mxu0 0.0
        %272 = vmatpush1.msra.mxu0 0.0
        %273 = vmatprep.subr.mxu0 0.0
        %274 = vmatpush1.msra.mxu0 0.0
        %275 = vmatprep.subr.mxu0 0.0
        %276 = vmatpush1.msra.mxu0 0.0
        %277 = vmatprep.subr.mxu0 0.0
        %278 = vmatpush1.msra.mxu0 0.0
        %279 = vmatprep.subr.mxu0 0.0
        %280 = vmatpush1.msra.mxu0 0.0
        %281 = vmatprep.subr.mxu0 0.0
        %282 = vmatpush1.msra.mxu0 0.0
        %283 = vmatprep.subr.mxu0 0.0
        %284 = vmatpush1.msra.mxu0 0.0
        %285 = vmatprep.subr.mxu0 0.0
        %286 = vmatpush1.msra.mxu0 0.0
        %287 = vmatprep.subr.mxu0 0.0
        %288 = vmatpush1.msra.mxu0 0.0
        %289 = vmatprep.subr.mxu0 0.0
        %290 = vmatpush1.msra.mxu0 0.0
        %291 = vmatprep.subr.mxu0 0.0
        %292 = vmatpush1.msra.mxu0 0.0
        %293 = vmatprep.subr.mxu0 0.0
        %294 = vmatpush1.msra.mxu0 0.0
        %295 = vmatprep.subr.mxu0 0.0
        %296 = vmatpush1.msra.mxu0 0.0
        %297 = vmatprep.mubr.f32.mxu0 0.0
        %298 = vmatmul.mubr.f32.gmra.mrb[0].mxu0 %v186
        %v299 = vpop.f32.mrb[0].mxu0
        %v300 = vadd.f32 0.0, %v299
        %v301 = vpop.f32.mrb[0].mxu0
        %302 = vmatprep.mubr.f32.mxu0 0.0
        %303 = vmatmul.mubr.f32.gmra.mrb[0].mxu0 %v189
        %v304 = vpop.f32.mrb[0].mxu0
        %v305 = vadd.f32 0.0, %v304
        %v306 = vpop.f32.mrb[0].mxu0
        %307 = vmatprep.mubr.f32.mxu0 0.0
        %308 = vmatmul.mubr.f32.gmra.mrb[0].mxu0 %v192
        %v309 = vpop.f32.mrb[0].mxu0
        %v310 = vadd.f32 0.0, %v309
        %v311 = vpop.f32.mrb[0].mxu0
        %312 = vmatprep.mubr.f32.mxu0 0.0
        %313 = vmatmul.mubr.f32.gmra.mrb[0].mxu0 %v195
        %v314 = vpop.f32.mrb[0].mxu0
        %v315 = vadd.f32 0.0, %v314
        %v316 = vpop.f32.mrb[0].mxu0
        %317 = vmatprep.mubr.f32.mxu0 0.0
        %318 = vmatmul.mubr.f32.gmra.mrb[0].mxu0 %v198
        %v319 = vpop.f32.mrb[0].mxu0
        %v320 = vadd.f32 0.0, %v319
        %v321 = vpop.f32.mrb[0].mxu0
        %322 = vmatprep.mubr.f32.mxu0 0.0
        %323 = vmatmul.mubr.f32.gmra.mrb[0].mxu0 %v201
        %v324 = vpop.f32.mrb[0].mxu0
        %v325 = vadd.f32 0.0, %v324
        %v326 = vpop.f32.mrb[0].mxu0
        %327 = vmatprep.mubr.f32.mxu0 0.0
        %328 = vmatmul.mubr.f32.gmra.mrb[0].mxu0 %v204
        %v329 = vpop.f32.mrb[0].mxu0
        %v330 = vadd.f32 0.0, %v329
        %v331 = vpop.f32.mrb[0].mxu0
        %332 = vmatprep.mubr.f32.mxu0 0.0
        %333 = vmatmul.mubr.f32.gmra.mrb[0].mxu0 %v207
        %v334 = vpop.f32.mrb[0].mxu0
        %v335 = vadd.f32 0.0, %v334
        %v336 = vpop.f32.mrb[0].mxu0
        %337 = vmatprep.mubr.f32.mxu0 0.0
        %338 = vmatmul.mubr.f32.gmra.mrb[0].mxu0 %v210
        %v339 = vpop.f32.mrb[0].mxu0
        %v340 = vadd.f32 0.0, %v339
        %v341 = vpop.f32.mrb[0].mxu0
        %342 = vmatprep.mubr.f32.mxu0 0.0
        %343 = vmatmul.mubr.f32.gmra.mrb[0].mxu0 %v213
        %v344 = vpop.f32.mrb[0].mxu0
        %v345 = vadd.f32 0.0, %v344
        %v346 = vpop.f32.mrb[0].mxu0
        %347 = vmatprep.mubr.f32.mxu0 0.0
        %348 = vmatmul.mubr.f32.gmra.mrb[0].mxu0 %v216
        %v349 = vpop.f32.mrb[0].mxu0
        %v350 = vadd.f32 0.0, %v349
        %v351 = vpop.f32.mrb[0].mxu0
        %352 = vmatprep.mubr.f32.mxu0 0.0
        %353 = vmatmul.mubr.f32.gmra.mrb[0].mxu0 %v219
        %v354 = vpop.f32.mrb[0].mxu0
        %v355 = vadd.f32 0.0, %v354
        %v356 = vpop.f32.mrb[0].mxu0
        %357 = vmatprep.mubr.f32.mxu0 0.0
        %358 = vmatmul.mubr.f32.gmra.mrb[0].mxu0 %v222
        %v359 = vpop.f32.mrb[0].mxu0
        %v360 = vadd.f32 0.0, %v359
        %v361 = vpop.f32.mrb[0].mxu0
        %362 = vmatprep.mubr.f32.mxu0 0.0
        %363 = vmatmul.mubr.f32.gmra.mrb[0].mxu0 %v225
        %v364 = vpop.f32.mrb[0].mxu0
        %v365 = vadd.f32 0.0, %v364
        %v366 = vpop.f32.mrb[0].mxu0
        %367 = vmatprep.mubr.f32.mxu0 0.0
        %368 = vmatmul.mubr.f32.gmra.mrb[0].mxu0 %v228
        %v369 = vpop.f32.mrb[0].mxu0
        %v370 = vadd.f32 0.0, %v369
        %v371 = vpop.f32.mrb[0].mxu0
        %372 = vmatprep.mubr.f32.mxu0 0.0
        %373 = vmatmul.mubr.f32.gmra.mrb[0].mxu0 %v231
        %v374 = vpop.f32.mrb[0].mxu0
        %v375 = vadd.f32 0.0, %v374
        %v376 = vpop.f32.mrb[0].mxu0
        %377 = vdwg.mxu0
        %v379 = vlaneseq
        %v380 = vshrl.u32 %v379, 7
        %v381 = vsub.s32 0, %v380
        %v382 = vrot.slane %v182, %v381
        %vm384 = vcmask 31744
        %v386 = vsel %vm384, %v183, 0
        %v389 = vsel %vm384, %v300, 0
        %v392 = vsel %vm384, %v305, 0
        %v395 = vsel %vm384, %v310, 0
        %v398 = vsel %vm384, %v315, 0
        %v401 = vsel %vm384, %v320, 0
        %v404 = vsel %vm384, %v325, 0
        %v407 = vsel %vm384, %v330, 0
        %v410 = vsel %vm384, %v335, 0
        %v413 = vsel %vm384, %v340, 0
        %v416 = vsel %vm384, %v345, 0
        %v419 = vsel %vm384, %v350, 0
        %v422 = vsel %vm384, %v355, 0
        %v425 = vsel %vm384, %v360, 0
        %v428 = vsel %vm384, %v365, 0
        %v431 = vsel %vm384, %v370, 0
        %v434 = vsel %vm384, %v375, 0
        %436 = vmatprep.subr.mxu0 0.0
        %437 = vmatpush1.xpose.msra.mxu0 %v389
        %438 = vmatprep.subr.mxu0 0.0
        %439 = vmatpush1.xpose.msra.mxu0 %v392
        %440 = vmatprep.subr.mxu0 0.0
        %441 = vmatpush1.xpose.msra.mxu0 %v395
        %442 = vmatprep.subr.mxu0 0.0
        %443 = vmatpush1.xpose.msra.mxu0 %v398
        %444 = vmatprep.subr.mxu0 0.0
        %445 = vmatpush1.xpose.msra.mxu0 %v401
        %446 = vmatprep.subr.mxu0 0.0
        %447 = vmatpush1.xpose.msra.mxu0 %v404
        %448 = vmatprep.subr.mxu0 0.0
        %449 = vmatpush1.xpose.msra.mxu0 %v407
        %450 = vmatprep.subr.mxu0 0.0
        %451 = vmatpush1.xpose.msra.mxu0 %v410
        %452 = vmatprep.subr.mxu0 0.0
        %453 = vmatpush1.xpose.msra.mxu0 %v413
        %454 = vmatprep.subr.mxu0 0.0
        %455 = vmatpush1.xpose.msra.mxu0 %v416
        %456 = vmatprep.subr.mxu0 0.0
        %457 = vmatpush1.xpose.msra.mxu0 %v419
        %458 = vmatprep.subr.mxu0 0.0
        %459 = vmatpush1.xpose.msra.mxu0 %v422
        %460 = vmatprep.subr.mxu0 0.0
        %461 = vmatpush1.xpose.msra.mxu0 %v425
        %462 = vmatprep.subr.mxu0 0.0
        %463 = vmatpush1.xpose.msra.mxu0 %v428
        %464 = vmatprep.subr.mxu0 0.0
        %465 = vmatpush1.xpose.msra.mxu0 %v431
        %466 = vmatprep.subr.mxu0 0.0
        %467 = vmatpush1.xpose.msra.mxu0 %v434
        %468 = vmatprep.subr.mxu0 0.0
        %469 = vmatpush1.xpose.msra.mxu0 0.0
        %470 = vmatprep.subr.mxu0 0.0
        %471 = vmatpush1.xpose.msra.mxu0 0.0
        %472 = vmatprep.subr.mxu0 0.0
        %473 = vmatpush1.xpose.msra.mxu0 0.0
        %474 = vmatprep.subr.mxu0 0.0
        %475 = vmatpush1.xpose.msra.mxu0 0.0
        %476 = vmatprep.subr.mxu0 0.0
        %477 = vmatpush1.xpose.msra.mxu0 0.0
        %478 = vmatprep.subr.mxu0 0.0
        %479 = vmatpush1.xpose.msra.mxu0 0.0
        %480 = vmatprep.subr.mxu0 0.0
        %481 = vmatpush1.xpose.msra.mxu0 0.0
        %482 = vmatprep.subr.mxu0 0.0
        %483 = vmatpush1.xpose.msra.mxu0 0.0
        %484 = vmatprep.subr.mxu0 0.0
        %485 = vmatpush1.xpose.msra.mxu0 0.0
        %486 = vmatprep.subr.mxu0 0.0
        %487 = vmatpush1.xpose.msra.mxu0 0.0
        %488 = vmatprep.subr.mxu0 0.0
        %489 = vmatpush1.xpose.msra.mxu0 0.0
        %490 = vmatprep.subr.mxu0 0.0
        %491 = vmatpush1.xpose.msra.mxu0 0.0
        %492 = vmatprep.subr.mxu0 0.0
        %493 = vmatpush1.xpose.msra.mxu0 0.0
        %494 = vmatprep.subr.mxu0 0.0
        %495 = vmatpush1.xpose.msra.mxu0 0.0
        %496 = vmatprep.subr.mxu0 0.0
        %497 = vmatpush1.xpose.msra.mxu0 0.0
        %498 = vmatprep.subr.mxu0 0.0
        %499 = vmatpush1.xpose.msra.mxu0 0.0
        %500 = vmatprep.mubr.f32.mxu0 0.0
        %501 = vmatmul.mubr.f32.gmra.mrb[0].mxu0 %v386
        %v502 = vpop.f32.mrb[0].mxu0
        %v503 = vadd.f32 %v382, %v502
        %v504 = vpop.f32.mrb[0].mxu0
        %505 = vdwg.mxu0
        %506 = vst [vmem:[%s161] sm:$0xff] %v503
        %s507 = sand.u32 %s93, 1
        %s508 = scalar_lea.sflag [#allocation3], %s507
        %s509 = sand.u32 %s93, 1
        %s510 = smul.addr %s509, 8
        %s511 = scalar_lea.vmem [#allocation2], %s510
        // Predicated region
        $region33: #{tpu_custom_call.1} parent=31 // pred_check
          %p512 = pneg %p103
        $region34: #{tpu_custom_call.1} parent=31 // pred_check_branch
          %514 = sbr.rel (%p512) target = $region36
        $region35: #{tpu_custom_call.1} parent=31 // pred_region
          %s516 = ssub.s32 128, 128
          %517 = vsyncadd %s508, %s516
          %s518 = smul.addr %s17, 128
          %s519 = scalar_lea.hbm %s3, %s518
          %s521 = sshll.u32 %s511, 4
          %s522 = int_to_ptr.vmem [resolvable:$true] %s521
          %524 = dma.vmem_to_hbm [thread:$0]  %s522, 128, %s519, %s508
        $region36: #{tpu_custom_call.1} parent=31 // pred_fallthru
          _
      $region32: #{tpu_custom_call.1} parent=5 // pred_fallthru
        _
      %p525 = scmp.le.s32.totalorder 2, %s12
      // Predicated region
      $region37: #{tpu_custom_call.1} parent=5 // pred_check
        %p526 = pneg %p525
      $region38: #{tpu_custom_call.1} parent=5 // pred_check_branch
        %528 = sbr.rel (%p526) target = $region40
      $region39: #{tpu_custom_call.1} parent=5 // pred_region
        %s529 = ssub.s32 %s12, 2
        // Predicated region
        $region41: #{tpu_custom_call.1} parent=39 // pred_check
          %p530 = pneg %p109
        $region42: #{tpu_custom_call.1} parent=39 // pred_check_branch
          %532 = sbr.rel (%p530) target = $region44
        $region43: #{tpu_custom_call.1} parent=39 // pred_region
          %s533 = sand.u32 %s94, 1
          %s534 = scalar_lea.sflag [#allocation3], %s533
          %s535 = sand.u32 %s94, 1
          %s536 = smul.addr %s535, 8
          %s537 = scalar_lea.vmem [#allocation2], %s536
          %538 = dma.done %s534, 128
        $region44: #{tpu_custom_call.1} parent=39 // pred_fallthru
          _
      $region40: #{tpu_custom_call.1} parent=5 // pred_fallthru
        _
    $region6: #{tpu_custom_call.1} parent=1 // loop_footer
      %s16 = sadd.s32 1, %s12
    $region7: #{tpu_custom_call.1} parent=1 // loop_footer_branch
      %11 = sbr.rel target = $region3
    $region8: #{tpu_custom_call.1} parent=1 // loop_exit
      _
    %539 = vsyncpa [#allocation3], 1
    %s540 = scalar_lea.sflag [#allocation3], 1
    %541 = vsyncpa %s540, 1

</llo_original>
